<compile_context>
chip_gen: v7x
topology: tpu7x:2x2x1
jax: 0.10.0
libtpu: 0.0.40
codegen_flags: <defaults>
</compile_context>

<pallas_src>
import functools

import jax
import jax.numpy as jnp
import numpy as np
from jax import lax
from jax.experimental import pallas as pl
from jax.experimental.pallas import tpu as pltpu


def _round_up(x: int, m: int) -> int:
    return ((x + m - 1) // m) * m


def _pick_tile(n: int) -> int:
    """Square tile for the (n_pad, n_pad) pair matrix."""
    if n <= 128:
        return 128          # single tile; pair count is tiny anyway
    if n <= 256:
        return 128          # keep a >= 2x2 grid so both v7x TensorCores get work
    if n <= 512:
        return 256          # ditto
    pad512 = _round_up(n, 512)
    pad256 = _round_up(n, 256)
    # 512-wide lane-dense stores reach ~85% of HBM roofline vs ~63% at 256;
    # only fall back when 512-padding inflates the padded pair matrix > 10%.
    if pad512 * pad512 > 1.1 * (pad256 * pad256):
        return 256
    return 512


def neighbor_kernel(aug_r_ref, aug_c_ref, lkey_ref, out_ref, *,
                    cl2, cu2, n_pad, tile, sentinel):
    """One (tile, tile) block of the pair matrix -> int32 compaction keys.

    A[i]   = [q_i, |q_i|^2, 1, 0, 0]          (q = (x, y, z, w_batch))
    B[:,j] = [-2 q_j, 1, |q_j|^2, 0, 0]
    (A @ B)[i, j] = |q_i - q_j|^2  =  d^2 + (w_i - w_j)^2
    so cross-sample (and padding) pairs automatically fail d^2 < cutoff^2.
    """
    d2 = jnp.dot(aug_r_ref[...], aug_c_ref[...],
                 preferred_element_type=jnp.float32,
                 precision=lax.Precision.HIGHEST)

    valid = d2 < cu2
    if cl2 > 0.0:                          # static: skipped for cutoff_lower == 0
        valid = jnp.logical_and(valid, d2 >= cl2)

    ti = pl.program_id(0)
    tj = pl.program_id(1)
    base = ti * (tile * n_pad) + tj * tile              # scalar per tile
    keys = jnp.where(valid, lkey_ref[...] + base, sentinel)

    # loop=False: drop i == j.  Only diagonal grid tiles can contain it; fold
    # the exclusion into the single store (no out_ref read-modify-write).
    @pl.when(ti != tj)
    def _():
        out_ref[...] = keys

    @pl.when(ti == tj)
    def _():
        r = lax.broadcasted_iota(jnp.int32, keys.shape, 0)
        c = lax.broadcasted_iota(jnp.int32, keys.shape, 1)
        out_ref[...] = jnp.where(r == c, sentinel, keys)


def optimized_distance(pos, batch=None, *, cutoff_lower=0.0, cutoff_upper=5.0,
                       max_num_pairs=-32):
    """JAX/Pallas equivalent of OptimizedDistance(strategy='brute').forward.

    Returns (edge_index, edge_weight, None), padded with (-1, -1) pairs
    (edge_weight 0) up to max_pairs, row-major pair order.
    """
    n = pos.shape[0]
    max_pairs = (-max_num_pairs) * n if max_num_pairs < 0 else max_num_pairs
    tile = _pick_tile(n)
    n_pad = _round_up(max(n, 1), tile)
    grid = (n_pad // tile, n_pad // tile)
    total = n_pad * n_pad
    # TODO(synk): int32 flat keys overflow for n_pad >= 46341; switch to int64 keys then.
    sentinel = total

    pos_f = pos.astype(jnp.float32)
    # Center positions: shrinks |r| so the norms-minus-cross cancellation stays
    # far below the cutoff scale (exact distances are recomputed in the glue).
    pos_c = pos_f - jnp.mean(pos_f, axis=0, keepdims=True)

    if batch is None:
        batch_i = jnp.zeros((n,), jnp.int32)
    else:
        batch_i = batch.astype(jnp.int32).reshape(-1)

    # Batch separation folded into a 4th coordinate: samples spaced 2*cutoff
    # apart along w, so cross-sample pairs fail d^2 < cutoff^2 with a 3*cutoff^2
    # margin against rounding.  Padding atoms share one w beyond all real
    # samples; padding-padding "pairs" sort after every real pair and are
    # masked in the glue.
    sep = 2.0 * float(cutoff_upper) if cutoff_upper > 0 else 1.0
    b_max = jnp.max(batch_i) if n > 0 else jnp.int32(0)
    w = jnp.zeros((n_pad,), jnp.float32)
    w = w.at[:n].set(sep * batch_i.astype(jnp.float32))
    w = w.at[n:].set(sep * (b_max.astype(jnp.float32) + 1.0))

    q = jnp.zeros((n_pad, 4), jnp.float32).at[:n, :3].set(pos_c).at[:, 3].set(w)
    qn = jnp.sum(q * q, axis=1)                           # |q|^2, (n_pad,)

    # MXU operands with the norms folded in; contraction dim padded to 8.
    aug_r = jnp.zeros((n_pad, 8), jnp.float32)
    aug_r = aug_r.at[:, :4].set(q).at[:, 4].set(qn).at[:, 5].set(1.0)
    aug_c = jnp.zeros((8, n_pad), jnp.float32)
    aug_c = aug_c.at[:4, :].set(-2.0 * q.T).at[4, :].set(1.0).at[5, :].set(qn)

    # Tile-local keys row*n_pad + col: constant block index -> fetched into
    # VMEM once; the kernel only adds a per-tile scalar base.
    r_loc = jnp.arange(tile, dtype=jnp.int32)
    lkey = r_loc[:, None] * jnp.int32(n_pad) + r_loc[None, :]

    kernel = functools.partial(
        neighbor_kernel,
        cl2=float(cutoff_lower) ** 2, cu2=float(cutoff_upper) ** 2,
        n_pad=n_pad, tile=tile, sentinel=sentinel)

    keys_mat = pl.pallas_call(
        kernel,
        grid=grid,
        in_specs=[
            pl.BlockSpec((tile, 8), lambda i, j: (i, 0)),     # augmented rows (MXU LHS)
            pl.BlockSpec((8, tile), lambda i, j: (0, j)),     # augmented cols (MXU RHS)
            pl.BlockSpec((tile, tile), lambda i, j: (0, 0)),  # constant local keys
        ],
        out_specs=pl.BlockSpec((tile, tile), lambda i, j: (i, j)),
        out_shape=jax.ShapeDtypeStruct((n_pad, n_pad), jnp.int32),
        compiler_params=pltpu.CompilerParams(
            dimension_semantics=("parallel", "parallel")),
    )(aug_r, aug_c, lkey)

    # --- glue: single-operand sort of int32 keys (no payload, no N^2 iota),
    # then decode + exact-distance recompute on only the <= max_pairs survivors.
    keys_s = lax.sort(keys_mat.reshape(-1))
    take = int(min(max_pairs, total))
    keys_s = keys_s[:take]
    src = keys_s // n_pad
    dst = keys_s - src * n_pad
    is_real = jnp.logical_and(keys_s < sentinel,
                              jnp.logical_and(src < n, dst < n))
    src_c = jnp.where(is_real, src, 0)
    dst_c = jnp.where(is_real, dst, 0)
    vec = pos_f[src_c] - pos_f[dst_c]                     # O(max_pairs) gather
    dist = jnp.sqrt(jnp.sum(vec * vec, axis=1))           # exact f32 distances
    edge_weight = jnp.where(is_real, dist, 0.0)
    src_o = jnp.where(is_real, src, -1)
    dst_o = jnp.where(is_real, dst, -1)
    if take < max_pairs:
        pad = max_pairs - take
        src_o = jnp.concatenate([src_o, jnp.full((pad,), -1, src_o.dtype)])
        dst_o = jnp.concatenate([dst_o, jnp.full((pad,), -1, dst_o.dtype)])
        edge_weight = jnp.concatenate(
            [edge_weight, jnp.zeros((pad,), edge_weight.dtype)])

    # TODO(synk): resize_to_fit=True / check_errors=True are host-side,
    # data-dependent-shape behaviors not expressible under jit; the padded
    # (-1,-1) form (silently truncated beyond max_pairs) is returned instead.
    # TODO(synk): long_edge_index=True means int64; x64 is off, so int32 is used.
    # TODO(synk): periodic-box (PBC) path not implemented; default box=None matched.
    edge_index = jnp.stack([src_o, dst_o]).astype(jnp.int32)
    return edge_index, edge_weight, None                  # return_vecs=False


if __name__ == "__main__":
    key = jax.random.PRNGKey(0)
    natoms = 10
    k1, k2 = jax.random.split(key)
    pos = jax.random.uniform(k1, (natoms, 3), dtype=jnp.float32)
    batch = jax.random.randint(k2, (natoms, 1), 0, 2, dtype=jnp.int32)

    fn = jax.jit(functools.partial(
        optimized_distance, cutoff_lower=0.0, cutoff_upper=5.0,
        max_num_pairs=-32))
    edge_index, edge_weight, edge_vec = fn(pos, batch)
    jax.block_until_ready((edge_index, edge_weight))

    # Host-side brute-force reference to sanity-check semantics.
    p = np.asarray(pos)
    b = np.asarray(batch).reshape(-1)
    ref = []
    for i in range(natoms):
        for j in range(natoms):
            if i == j or b[i] != b[j]:
                continue
            d = float(np.linalg.norm(p[i] - p[j]))
            if 0.0 <= d < 5.0:
                ref.append((i, j, d))

    ei = np.asarray(edge_index)
    ew = np.asarray(edge_weight)
    m = ei[0] >= 0
    found = list(zip(ei[0][m].tolist(), ei[1][m].tolist(), ew[m].tolist()))
    assert len(found) == len(ref), (len(found), len(ref))
    for (i0, j0, d0), (i1, j1, d1) in zip(sorted(found), sorted(ref)):
        assert i0 == i1 and j0 == j1 and abs(d0 - d1) < 1e-4, (i0, j0, d0, d1)

    print("KERNEL_OK")
</pallas_src>

<mosaic_0001>
module attributes {stable_mosaic.version = 11 : i64} {
  func.func @neighbor_kernel(%arg0: i32, %arg1: i32, %arg2: memref<128x8xf32, #tpu.memory_space<vmem>>, %arg3: memref<8x128xf32, #tpu.memory_space<vmem>>, %arg4: memref<128x128xi32, #tpu.memory_space<vmem>>, %arg5: memref<128x128xi32, #tpu.memory_space<vmem>>) attributes {dimension_semantics = [#tpu.dimension_semantics<parallel>, #tpu.dimension_semantics<parallel>], iteration_bounds = array<i64: 1, 1>, scalar_prefetch = 0 : i64, scratch_operands = 0 : i64, tpu.core_type = #tpu.core_type<tc>, window_params = [{transform_indices = @transform_0, window_bounds = array<i64: 128, 8>}, {transform_indices = @transform_1, window_bounds = array<i64: 8, 128>}, {pipeline_mode = #tpu.pipeline_mode<synchronous>, transform_indices = @transform_2, window_bounds = array<i64: 128, 128>}, {transform_indices = @transform_3, window_bounds = array<i64: 128, 128>}]} {
    %c0 = arith.constant 0 : index
    %c0_0 = arith.constant 0 : index
    %0 = vector.load %arg2[%c0, %c0_0] : memref<128x8xf32, #tpu.memory_space<vmem>>, vector<128x8xf32>
    %c0_1 = arith.constant 0 : index
    %c0_2 = arith.constant 0 : index
    %1 = vector.load %arg3[%c0_1, %c0_2] : memref<8x128xf32, #tpu.memory_space<vmem>>, vector<8x128xf32>
    %cst = arith.constant dense<0.000000e+00> : vector<128x128xf32>
    %2 = tpu.matmul %0, %1, %cst {dimension_numbers = #tpu.dot_dimension_numbers<[1], [0], [0], [1], [0, 0, 1, 1], [], []>, precision = #tpu.contract_precision<fp32>} : vector<128x8xf32>, vector<8x128xf32>, vector<128x128xf32> -> vector<128x128xf32>
    %cst_3 = arith.constant 2.500000e+01 : f32
    %3 = vector.broadcast %cst_3 : f32 to vector<128x128xf32>
    %4 = arith.cmpf olt, %2, %3 : vector<128x128xf32>
    %c16384_i32 = arith.constant 16384 : i32
    %5 = arith.muli %arg0, %c16384_i32 : i32
    %c128_i32 = arith.constant 128 : i32
    %6 = arith.muli %arg1, %c128_i32 : i32
    %7 = arith.addi %5, %6 : i32
    %c0_4 = arith.constant 0 : index
    %c0_5 = arith.constant 0 : index
    %8 = vector.load %arg4[%c0_4, %c0_5] : memref<128x128xi32, #tpu.memory_space<vmem>>, vector<128x128xi32>
    %9 = vector.broadcast %7 : i32 to vector<128x128xi32>
    %10 = arith.addi %8, %9 : vector<128x128xi32>
    %c16384_i32_6 = arith.constant 16384 : i32
    %11 = vector.broadcast %c16384_i32_6 : i32 to vector<128x128xi32>
    %12 = arith.select %4, %10, %11 : vector<128x128xi1>, vector<128x128xi32>
    %13 = arith.cmpi ne, %arg0, %arg1 : i32
    %14 = arith.extui %13 : i1 to i32
    %c0_i32 = arith.constant 0 : i32
    %15 = arith.cmpi ne, %14, %c0_i32 : i32
    scf.if %15 {
      %c0_8 = arith.constant 0 : index
      %c0_9 = arith.constant 0 : index
      %19 = vector.load %arg5[%c0_8, %c0_9] : memref<128x128xi32, #tpu.memory_space<vmem>>, vector<128x128xi32>
      tpu.vector_store %arg5[%c0_8, %c0_9], %12 {strides = array<i32>} : memref<128x128xi32, #tpu.memory_space<vmem>>, vector<128x128xi32>,
    } else {
    }
    %16 = arith.cmpi eq, %arg0, %arg1 : i32
    %17 = arith.extui %16 : i1 to i32
    %c0_i32_7 = arith.constant 0 : i32
    %18 = arith.cmpi ne, %17, %c0_i32_7 : i32
    scf.if %18 {
      %19 = tpu.iota {dimensions = array<i32: 0>} : vector<128x128xi32>
      %20 = tpu.iota {dimensions = array<i32: 1>} : vector<128x128xi32>
      %21 = arith.cmpi eq, %19, %20 : vector<128x128xi32>
      %c16384_i32_8 = arith.constant 16384 : i32
      %22 = vector.broadcast %c16384_i32_8 : i32 to vector<128x128xi32>
      %23 = arith.select %21, %22, %12 : vector<128x128xi1>, vector<128x128xi32>
      %c0_9 = arith.constant 0 : index
      %c0_10 = arith.constant 0 : index
      %24 = vector.load %arg5[%c0_9, %c0_10] : memref<128x128xi32, #tpu.memory_space<vmem>>, vector<128x128xi32>
      tpu.vector_store %arg5[%c0_9, %c0_10], %23 {strides = array<i32>} : memref<128x128xi32, #tpu.memory_space<vmem>>, vector<128x128xi32>,
    } else {
    }
    return
  }
  func.func @transform_0(%arg0: i32, %arg1: i32) -> (i32, i32) {
    %c0_i32 = arith.constant 0 : i32
    %c0_i32_0 = arith.constant 0 : i32
    return %arg0, %c0_i32 : i32, i32
  }
  func.func @transform_1(%arg0: i32, %arg1: i32) -> (i32, i32) {
    %c0_i32 = arith.constant 0 : i32
    %c0_i32_0 = arith.constant 0 : i32
    return %c0_i32, %arg1 : i32, i32
  }
  func.func @transform_2(%arg0: i32, %arg1: i32) -> (i32, i32) {
    %c0_i32 = arith.constant 0 : i32
    %c0_i32_0 = arith.constant 0 : i32
    %c0_i32_1 = arith.constant 0 : i32
    return %c0_i32, %c0_i32_0 : i32, i32
  }
  func.func @transform_3(%arg0: i32, %arg1: i32) -> (i32, i32) {
    %c0_i32 = arith.constant 0 : i32
    return %arg0, %arg1 : i32, i32
  }
}

</mosaic_0001>

<llo_original>
// kernel: optimized_distance.1
$region0: #{optimized_distance.1}
  #allocation0 [shape = 'u32[]', space=smem, size = 0x4, offset = 0x4, fixed_abs, tag = 'smem constant byte address 0x4 - core index']
  #allocation1 [shape = 'u32[144,128]{1,0:T(1,128)}', space=vmem, size = 0x12000, scoped, tag = 'internal scratch']
  %s0 = inlined_call_operand.vmem [shape: f32[128,8], index: 0, kind: input, shape index: {}]
  %s1 = inlined_call_operand.vmem [shape: f32[8,128], index: 1, kind: input, shape index: {}]
  %s2 = inlined_call_operand.vmem [shape: s32[128,128], index: 2, kind: input, shape index: {}]
  %s3 = inlined_call_operand.vmem [shape: s32[128,128], index: 3, kind: output, shape index: {}]
  %s4 = sld [smem:[#allocation0]]
  $region30: #{optimized_distance.1} parent=0
    _
  %s6 = ssub.s32 1, %s4
  %s7 = scalar_select 0, %s6, %s4
  // Predicated region
  $region2: #{optimized_distance.1} parent=0 // pred_check
    _
  $region3: #{optimized_distance.1} parent=0 // pred_check_branch
    %9 = sbr.rel (0) target = $region5
  $region4: #{optimized_distance.1} parent=0 // pred_region
    _
  $region5: #{optimized_distance.1} parent=0 // pred_fallthru
    _
  // Predicated region
  $region6: #{optimized_distance.1} parent=0 // pred_check
    _
  $region7: #{optimized_distance.1} parent=0 // pred_check_branch
    %11 = sbr.rel (0) target = $region9
  $region8: #{optimized_distance.1} parent=0 // pred_region
    _
  $region9: #{optimized_distance.1} parent=0 // pred_fallthru
    _
  // Predicated region
  $region10: #{optimized_distance.1} parent=0 // pred_check
    _
  $region11: #{optimized_distance.1} parent=0 // pred_check_branch
    %13 = sbr.rel (0) target = $region13
  $region12: #{optimized_distance.1} parent=0 // pred_region
    _
  $region13: #{optimized_distance.1} parent=0 // pred_fallthru
    _
  %v14 = vld [vmem:[%s0] sm:$0xff]
  %v15 = vld [vmem:[%s0 + $0x8] sm:$0xff]
  %v16 = vld [vmem:[%s0 + $0x10] sm:$0xff]
  %v17 = vld [vmem:[%s0 + $0x18] sm:$0xff]
  %v18 = vld [vmem:[%s0 + $0x20] sm:$0xff]
  %v19 = vld [vmem:[%s0 + $0x28] sm:$0xff]
  %v20 = vld [vmem:[%s0 + $0x30] sm:$0xff]
  %v21 = vld [vmem:[%s0 + $0x38] sm:$0xff]
  %v22 = vld [vmem:[%s0 + $0x40] sm:$0xff]
  %v23 = vld [vmem:[%s0 + $0x48] sm:$0xff]
  %v24 = vld [vmem:[%s0 + $0x50] sm:$0xff]
  %v25 = vld [vmem:[%s0 + $0x58] sm:$0xff]
  %v26 = vld [vmem:[%s0 + $0x60] sm:$0xff]
  %v27 = vld [vmem:[%s0 + $0x68] sm:$0xff]
  %v28 = vld [vmem:[%s0 + $0x70] sm:$0xff]
  %v29 = vld [vmem:[%s0 + $0x78] sm:$0xff]
  %v30 = vld [vmem:[%s1] sm:$0xff]
  %vm31 = vcmask 64512
  %v33 = vsel %vm31, %v14, 0
  %v36 = vsel %vm31, %v15, 0
  %v39 = vsel %vm31, %v16, 0
  %v42 = vsel %vm31, %v17, 0
  %v45 = vsel %vm31, %v18, 0
  %v48 = vsel %vm31, %v19, 0
  %v51 = vsel %vm31, %v20, 0
  %v54 = vsel %vm31, %v21, 0
  %v57 = vsel %vm31, %v22, 0
  %v60 = vsel %vm31, %v23, 0
  %v63 = vsel %vm31, %v24, 0
  %v66 = vsel %vm31, %v25, 0
  %v69 = vsel %vm31, %v26, 0
  %v72 = vsel %vm31, %v27, 0
  %v75 = vsel %vm31, %v28, 0
  %v78 = vsel %vm31, %v29, 0
  %80 = vmatprep.subr.mxu0 0.0
  %v81 = vand.u32 %v30, 4294901760
  %82 = vmatpush1.msra.mxu0 %v81
  %83 = vmatprep.subr.mxu0 0.0
  %84 = vmatpush1.msra.mxu0 0.0
  %85 = vmatprep.subr.mxu0 0.0
  %86 = vmatpush1.msra.mxu0 0.0
  %87 = vmatprep.subr.mxu0 0.0
  %88 = vmatpush1.msra.mxu0 0.0
  %89 = vmatprep.subr.mxu0 0.0
  %90 = vmatpush1.msra.mxu0 0.0
  %91 = vmatprep.subr.mxu0 0.0
  %92 = vmatpush1.msra.mxu0 0.0
  %93 = vmatprep.subr.mxu0 0.0
  %94 = vmatpush1.msra.mxu0 0.0
  %95 = vmatprep.subr.mxu0 0.0
  %96 = vmatpush1.msra.mxu0 0.0
  %97 = vmatprep.subr.mxu0 0.0
  %98 = vmatpush1.msra.mxu0 0.0
  %99 = vmatprep.subr.mxu0 0.0
  %100 = vmatpush1.msra.mxu0 0.0
  %101 = vmatprep.subr.mxu0 0.0
  %102 = vmatpush1.msra.mxu0 0.0
  %103 = vmatprep.subr.mxu0 0.0
  %104 = vmatpush1.msra.mxu0 0.0
  %105 = vmatprep.subr.mxu0 0.0
  %106 = vmatpush1.msra.mxu0 0.0
  %107 = vmatprep.subr.mxu0 0.0
  %108 = vmatpush1.msra.mxu0 0.0
  %109 = vmatprep.subr.mxu0 0.0
  %110 = vmatpush1.msra.mxu0 0.0
  %111 = vmatprep.subr.mxu0 0.0
  %112 = vmatpush1.msra.mxu0 0.0
  %113 = vmatprep.subr.mxu0 0.0
  %114 = vmatpush1.msra.mxu0 0.0
  %115 = vmatprep.subr.mxu0 0.0
  %116 = vmatpush1.msra.mxu0 0.0
  %117 = vmatprep.subr.mxu0 0.0
  %118 = vmatpush1.msra.mxu0 0.0
  %119 = vmatprep.subr.mxu0 0.0
  %120 = vmatpush1.msra.mxu0 0.0
  %121 = vmatprep.subr.mxu0 0.0
  %122 = vmatpush1.msra.mxu0 0.0
  %123 = vmatprep.subr.mxu0 0.0
  %124 = vmatpush1.msra.mxu0 0.0
  %125 = vmatprep.subr.mxu0 0.0
  %126 = vmatpush1.msra.mxu0 0.0
  %127 = vmatprep.subr.mxu0 0.0
  %128 = vmatpush1.msra.mxu0 0.0
  %129 = vmatprep.subr.mxu0 0.0
  %130 = vmatpush1.msra.mxu0 0.0
  %131 = vmatprep.subr.mxu0 0.0
  %132 = vmatpush1.msra.mxu0 0.0
  %133 = vmatprep.subr.mxu0 0.0
  %134 = vmatpush1.msra.mxu0 0.0
  %135 = vmatprep.subr.mxu0 0.0
  %136 = vmatpush1.msra.mxu0 0.0
  %137 = vmatprep.subr.mxu0 0.0
  %138 = vmatpush1.msra.mxu0 0.0
  %139 = vmatprep.subr.mxu0 0.0
  %140 = vmatpush1.msra.mxu0 0.0
  %141 = vmatprep.subr.mxu0 0.0
  %142 = vmatpush1.msra.mxu0 0.0
  %143 = vmatprep.subr.mxu0 0.0
  %144 = vmatpush1.msra.mxu0 0.0
  %145 = vmatprep.mubr.f32.mxu0 0.0
  %v146 = vand.u32 %v33, 4294901760
  %v147 = vsub.f32 %v33, %v146
  %v148 = vand.u32 %v147, 4294901760
  %v149 = vsub.f32 %v147, %v148
  %v150 = vand.u32 %v149, 4294901760
  %151 = vmatmul.mubr.f32.gmra.mrb[0].mxu0 %v150
  %v152 = vpop.f32.mrb[0].mxu0
  %v153 = vadd.f32 0.0, %v152
  %v154 = vpop.f32.mrb[0].mxu0
  %155 = vmatprep.mubr.f32.mxu0 0.0
  %v156 = vand.u32 %v36, 4294901760
  %v157 = vsub.f32 %v36, %v156
  %v158 = vand.u32 %v157, 4294901760
  %v159 = vsub.f32 %v157, %v158
  %v160 = vand.u32 %v159, 4294901760
  %161 = vmatmul.mubr.f32.gmra.mrb[0].mxu0 %v160
  %v162 = vpop.f32.mrb[0].mxu0
  %v163 = vadd.f32 0.0, %v162
  %v164 = vpop.f32.mrb[0].mxu0
  %165 = vmatprep.mubr.f32.mxu0 0.0
  %v166 = vand.u32 %v39, 4294901760
  %v167 = vsub.f32 %v39, %v166
  %v168 = vand.u32 %v167, 4294901760
  %v169 = vsub.f32 %v167, %v168
  %v170 = vand.u32 %v169, 4294901760
  %171 = vmatmul.mubr.f32.gmra.mrb[0].mxu0 %v170
  %v172 = vpop.f32.mrb[0].mxu0
  %v173 = vadd.f32 0.0, %v172
  %v174 = vpop.f32.mrb[0].mxu0
  %175 = vmatprep.mubr.f32.mxu0 0.0
  %v176 = vand.u32 %v42, 4294901760
  %v177 = vsub.f32 %v42, %v176
  %v178 = vand.u32 %v177, 4294901760
  %v179 = vsub.f32 %v177, %v178
  %v180 = vand.u32 %v179, 4294901760
  %181 = vmatmul.mubr.f32.gmra.mrb[0].mxu0 %v180
  %v182 = vpop.f32.mrb[0].mxu0
  %v183 = vadd.f32 0.0, %v182
  %v184 = vpop.f32.mrb[0].mxu0
  %185 = vmatprep.mubr.f32.mxu0 0.0
  %v186 = vand.u32 %v45, 4294901760
  %v187 = vsub.f32 %v45, %v186
  %v188 = vand.u32 %v187, 4294901760
  %v189 = vsub.f32 %v187, %v188
  %v190 = vand.u32 %v189, 4294901760
  %191 = vmatmul.mubr.f32.gmra.mrb[0].mxu0 %v190
  %v192 = vpop.f32.mrb[0].mxu0
  %v193 = vadd.f32 0.0, %v192
  %v194 = vpop.f32.mrb[0].mxu0
  %195 = vmatprep.mubr.f32.mxu0 0.0
  %v196 = vand.u32 %v48, 4294901760
  %v197 = vsub.f32 %v48, %v196
  %v198 = vand.u32 %v197, 4294901760
  %v199 = vsub.f32 %v197, %v198
  %v200 = vand.u32 %v199, 4294901760
  %201 = vmatmul.mubr.f32.gmra.mrb[0].mxu0 %v200
  %v202 = vpop.f32.mrb[0].mxu0
  %v203 = vadd.f32 0.0, %v202
  %v204 = vpop.f32.mrb[0].mxu0
  %205 = vmatprep.mubr.f32.mxu0 0.0
  %v206 = vand.u32 %v51, 4294901760
  %v207 = vsub.f32 %v51, %v206
  %v208 = vand.u32 %v207, 4294901760
  %v209 = vsub.f32 %v207, %v208
  %v210 = vand.u32 %v209, 4294901760
  %211 = vmatmul.mubr.f32.gmra.mrb[0].mxu0 %v210
  %v212 = vpop.f32.mrb[0].mxu0
  %v213 = vadd.f32 0.0, %v212
  %v214 = vpop.f32.mrb[0].mxu0
  %215 = vmatprep.mubr.f32.mxu0 0.0
  %v216 = vand.u32 %v54, 4294901760
  %v217 = vsub.f32 %v54, %v216
  %v218 = vand.u32 %v217, 4294901760
  %v219 = vsub.f32 %v217, %v218
  %v220 = vand.u32 %v219, 4294901760
  %221 = vmatmul.mubr.f32.gmra.mrb[0].mxu0 %v220
  %v222 = vpop.f32.mrb[0].mxu0
  %v223 = vadd.f32 0.0, %v222
  %v224 = vpop.f32.mrb[0].mxu0
  %225 = vmatprep.mubr.f32.mxu0 0.0
  %v226 = vand.u32 %v57, 4294901760
  %v227 = vsub.f32 %v57, %v226
  %v228 = vand.u32 %v227, 4294901760
  %v229 = vsub.f32 %v227, %v228
  %v230 = vand.u32 %v229, 4294901760
  %231 = vmatmul.mubr.f32.gmra.mrb[0].mxu0 %v230
  %v232 = vpop.f32.mrb[0].mxu0
  %v233 = vadd.f32 0.0, %v232
  %v234 = vpop.f32.mrb[0].mxu0
  %235 = vmatprep.mubr.f32.mxu0 0.0
  %v236 = vand.u32 %v60, 4294901760
  %v237 = vsub.f32 %v60, %v236
  %v238 = vand.u32 %v237, 4294901760
  %v239 = vsub.f32 %v237, %v238
  %v240 = vand.u32 %v239, 4294901760
  %241 = vmatmul.mubr.f32.gmra.mrb[0].mxu0 %v240
  %v242 = vpop.f32.mrb[0].mxu0
  %v243 = vadd.f32 0.0, %v242
  %v244 = vpop.f32.mrb[0].mxu0
  %245 = vmatprep.mubr.f32.mxu0 0.0
  %v246 = vand.u32 %v63, 4294901760
  %v247 = vsub.f32 %v63, %v246
  %v248 = vand.u32 %v247, 4294901760
  %v249 = vsub.f32 %v247, %v248
  %v250 = vand.u32 %v249, 4294901760
  %251 = vmatmul.mubr.f32.gmra.mrb[0].mxu0 %v250
  %v252 = vpop.f32.mrb[0].mxu0
  %v253 = vadd.f32 0.0, %v252
  %v254 = vpop.f32.mrb[0].mxu0
  %255 = vmatprep.mubr.f32.mxu0 0.0
  %v256 = vand.u32 %v66, 4294901760
  %v257 = vsub.f32 %v66, %v256
  %v258 = vand.u32 %v257, 4294901760
  %v259 = vsub.f32 %v257, %v258
  %v260 = vand.u32 %v259, 4294901760
  %261 = vmatmul.mubr.f32.gmra.mrb[0].mxu0 %v260
  %v262 = vpop.f32.mrb[0].mxu0
  %v263 = vadd.f32 0.0, %v262
  %v264 = vpop.f32.mrb[0].mxu0
  %265 = vmatprep.mubr.f32.mxu0 0.0
  %v266 = vand.u32 %v69, 4294901760
  %v267 = vsub.f32 %v69, %v266
  %v268 = vand.u32 %v267, 4294901760
  %v269 = vsub.f32 %v267, %v268
  %v270 = vand.u32 %v269, 4294901760
  %271 = vmatmul.mubr.f32.gmra.mrb[0].mxu0 %v270
  %v272 = vpop.f32.mrb[0].mxu0
  %v273 = vadd.f32 0.0, %v272
  %v274 = vpop.f32.mrb[0].mxu0
  %275 = vmatprep.mubr.f32.mxu0 0.0
  %v276 = vand.u32 %v72, 4294901760
  %v277 = vsub.f32 %v72, %v276
  %v278 = vand.u32 %v277, 4294901760
  %v279 = vsub.f32 %v277, %v278
  %v280 = vand.u32 %v279, 4294901760
  %281 = vmatmul.mubr.f32.gmra.mrb[0].mxu0 %v280
  %v282 = vpop.f32.mrb[0].mxu0
  %v283 = vadd.f32 0.0, %v282
  %v284 = vpop.f32.mrb[0].mxu0
  %285 = vmatprep.mubr.f32.mxu0 0.0
  %v286 = vand.u32 %v75, 4294901760
  %v287 = vsub.f32 %v75, %v286
  %v288 = vand.u32 %v287, 4294901760
  %v289 = vsub.f32 %v287, %v288
  %v290 = vand.u32 %v289, 4294901760
  %291 = vmatmul.mubr.f32.gmra.mrb[0].mxu0 %v290
  %v292 = vpop.f32.mrb[0].mxu0
  %v293 = vadd.f32 0.0, %v292
  %v294 = vpop.f32.mrb[0].mxu0
  %295 = vmatprep.mubr.f32.mxu0 0.0
  %v296 = vand.u32 %v78, 4294901760
  %v297 = vsub.f32 %v78, %v296
  %v298 = vand.u32 %v297, 4294901760
  %v299 = vsub.f32 %v297, %v298
  %v300 = vand.u32 %v299, 4294901760
  %301 = vmatmul.mubr.f32.gmra.mrb[0].mxu0 %v300
  %v302 = vpop.f32.mrb[0].mxu0
  %v303 = vadd.f32 0.0, %v302
  %v304 = vpop.f32.mrb[0].mxu0
  %305 = vdwg.mxu0
  %306 = vmatprep.subr.mxu0 0.0
  %v307 = vand.u32 %v30, 4294901760
  %v308 = vsub.f32 %v30, %v307
  %v309 = vand.u32 %v308, 4294901760
  %v310 = vsub.f32 %v308, %v309
  %v311 = vand.u32 %v310, 4294901760
  %312 = vmatpush1.msra.mxu0 %v311
  %313 = vmatprep.subr.mxu0 0.0
  %314 = vmatpush1.msra.mxu0 0.0
  %315 = vmatprep.subr.mxu0 0.0
  %316 = vmatpush1.msra.mxu0 0.0
  %317 = vmatprep.subr.mxu0 0.0
  %318 = vmatpush1.msra.mxu0 0.0
  %319 = vmatprep.subr.mxu0 0.0
  %320 = vmatpush1.msra.mxu0 0.0
  %321 = vmatprep.subr.mxu0 0.0
  %322 = vmatpush1.msra.mxu0 0.0
  %323 = vmatprep.subr.mxu0 0.0
  %324 = vmatpush1.msra.mxu0 0.0
  %325 = vmatprep.subr.mxu0 0.0
  %326 = vmatpush1.msra.mxu0 0.0
  %327 = vmatprep.subr.mxu0 0.0
  %328 = vmatpush1.msra.mxu0 0.0
  %329 = vmatprep.subr.mxu0 0.0
  %330 = vmatpush1.msra.mxu0 0.0
  %331 = vmatprep.subr.mxu0 0.0
  %332 = vmatpush1.msra.mxu0 0.0
  %333 = vmatprep.subr.mxu0 0.0
  %334 = vmatpush1.msra.mxu0 0.0
  %335 = vmatprep.subr.mxu0 0.0
  %336 = vmatpush1.msra.mxu0 0.0
  %337 = vmatprep.subr.mxu0 0.0
  %338 = vmatpush1.msra.mxu0 0.0
  %339 = vmatprep.subr.mxu0 0.0
  %340 = vmatpush1.msra.mxu0 0.0
  %341 = vmatprep.subr.mxu0 0.0
  %342 = vmatpush1.msra.mxu0 0.0
  %343 = vmatprep.subr.mxu0 0.0
  %344 = vmatpush1.msra.mxu0 0.0
  %345 = vmatprep.subr.mxu0 0.0
  %346 = vmatpush1.msra.mxu0 0.0
  %347 = vmatprep.subr.mxu0 0.0
  %348 = vmatpush1.msra.mxu0 0.0
  %349 = vmatprep.subr.mxu0 0.0
  %350 = vmatpush1.msra.mxu0 0.0
  %351 = vmatprep.subr.mxu0 0.0
  %352 = vmatpush1.msra.mxu0 0.0
  %353 = vmatprep.subr.mxu0 0.0
  %354 = vmatpush1.msra.mxu0 0.0
  %355 = vmatprep.subr.mxu0 0.0
  %356 = vmatpush1.msra.mxu0 0.0
  %357 = vmatprep.subr.mxu0 0.0
  %358 = vmatpush1.msra.mxu0 0.0
  %359 = vmatprep.subr.mxu0 0.0
  %360 = vmatpush1.msra.mxu0 0.0
  %361 = vmatprep.subr.mxu0 0.0
  %362 = vmatpush1.msra.mxu0 0.0
  %363 = vmatprep.subr.mxu0 0.0
  %364 = vmatpush1.msra.mxu0 0.0
  %365 = vmatprep.subr.mxu0 0.0
  %366 = vmatpush1.msra.mxu0 0.0
  %367 = vmatprep.subr.mxu0 0.0
  %368 = vmatpush1.msra.mxu0 0.0
  %369 = vmatprep.subr.mxu0 0.0
  %370 = vmatpush1.msra.mxu0 0.0
  %371 = vmatprep.subr.mxu0 0.0
  %372 = vmatpush1.msra.mxu0 0.0
  %373 = vmatprep.subr.mxu0 0.0
  %374 = vmatpush1.msra.mxu0 0.0
  %375 = vmatprep.mubr.f32.mxu0 0.0
  %v376 = vand.u32 %v33, 4294901760
  %377 = vmatmul.mubr.f32.gmra.mrb[0].mxu0 %v376
  %v378 = vpop.f32.mrb[0].mxu0
  %v379 = vadd.f32 %v153, %v378
  %v380 = vpop.f32.mrb[0].mxu0
  %381 = vmatprep.mubr.f32.mxu0 0.0
  %v382 = vand.u32 %v36, 4294901760
  %383 = vmatmul.mubr.f32.gmra.mrb[0].mxu0 %v382
  %v384 = vpop.f32.mrb[0].mxu0
  %v385 = vadd.f32 %v163, %v384
  %v386 = vpop.f32.mrb[0].mxu0
  %387 = vmatprep.mubr.f32.mxu0 0.0
  %v388 = vand.u32 %v39, 4294901760
  %389 = vmatmul.mubr.f32.gmra.mrb[0].mxu0 %v388
  %v390 = vpop.f32.mrb[0].mxu0
  %v391 = vadd.f32 %v173, %v390
  %v392 = vpop.f32.mrb[0].mxu0
  %393 = vmatprep.mubr.f32.mxu0 0.0
  %v394 = vand.u32 %v42, 4294901760
  %395 = vmatmul.mubr.f32.gmra.mrb[0].mxu0 %v394
  %v396 = vpop.f32.mrb[0].mxu0
  %v397 = vadd.f32 %v183, %v396
  %v398 = vpop.f32.mrb[0].mxu0
  %399 = vmatprep.mubr.f32.mxu0 0.0
  %v400 = vand.u32 %v45, 4294901760
  %401 = vmatmul.mubr.f32.gmra.mrb[0].mxu0 %v400
  %v402 = vpop.f32.mrb[0].mxu0
  %v403 = vadd.f32 %v193, %v402
  %v404 = vpop.f32.mrb[0].mxu0
  %405 = vmatprep.mubr.f32.mxu0 0.0
  %v406 = vand.u32 %v48, 4294901760
  %407 = vmatmul.mubr.f32.gmra.mrb[0].mxu0 %v406
  %v408 = vpop.f32.mrb[0].mxu0
  %v409 = vadd.f32 %v203, %v408
  %v410 = vpop.f32.mrb[0].mxu0
  %411 = vmatprep.mubr.f32.mxu0 0.0
  %v412 = vand.u32 %v51, 4294901760
  %413 = vmatmul.mubr.f32.gmra.mrb[0].mxu0 %v412
  %v414 = vpop.f32.mrb[0].mxu0
  %v415 = vadd.f32 %v213, %v414
  %v416 = vpop.f32.mrb[0].mxu0
  %417 = vmatprep.mubr.f32.mxu0 0.0
  %v418 = vand.u32 %v54, 4294901760
  %419 = vmatmul.mubr.f32.gmra.mrb[0].mxu0 %v418
  %v420 = vpop.f32.mrb[0].mxu0
  %v421 = vadd.f32 %v223, %v420
  %v422 = vpop.f32.mrb[0].mxu0
  %423 = vmatprep.mubr.f32.mxu0 0.0
  %v424 = vand.u32 %v57, 4294901760
  %425 = vmatmul.mubr.f32.gmra.mrb[0].mxu0 %v424
  %v426 = vpop.f32.mrb[0].mxu0
  %v427 = vadd.f32 %v233, %v426
  %v428 = vpop.f32.mrb[0].mxu0
  %429 = vmatprep.mubr.f32.mxu0 0.0
  %v430 = vand.u32 %v60, 4294901760
  %431 = vmatmul.mubr.f32.gmra.mrb[0].mxu0 %v430
  %v432 = vpop.f32.mrb[0].mxu0
  %v433 = vadd.f32 %v243, %v432
  %v434 = vpop.f32.mrb[0].mxu0
  %435 = vmatprep.mubr.f32.mxu0 0.0
  %v436 = vand.u32 %v63, 4294901760
  %437 = vmatmul.mubr.f32.gmra.mrb[0].mxu0 %v436
  %v438 = vpop.f32.mrb[0].mxu0
  %v439 = vadd.f32 %v253, %v438
  %v440 = vpop.f32.mrb[0].mxu0
  %441 = vmatprep.mubr.f32.mxu0 0.0
  %v442 = vand.u32 %v66, 4294901760
  %443 = vmatmul.mubr.f32.gmra.mrb[0].mxu0 %v442
  %v444 = vpop.f32.mrb[0].mxu0
  %v445 = vadd.f32 %v263, %v444
  %v446 = vpop.f32.mrb[0].mxu0
  %447 = vmatprep.mubr.f32.mxu0 0.0
  %v448 = vand.u32 %v69, 4294901760
  %449 = vmatmul.mubr.f32.gmra.mrb[0].mxu0 %v448
  %v450 = vpop.f32.mrb[0].mxu0
  %v451 = vadd.f32 %v273, %v450
  %v452 = vpop.f32.mrb[0].mxu0
  %453 = vmatprep.mubr.f32.mxu0 0.0
  %v454 = vand.u32 %v72, 4294901760
  %455 = vmatmul.mubr.f32.gmra.mrb[0].mxu0 %v454
  %v456 = vpop.f32.mrb[0].mxu0
  %v457 = vadd.f32 %v283, %v456
  %v458 = vpop.f32.mrb[0].mxu0
  %459 = vmatprep.mubr.f32.mxu0 0.0
  %v460 = vand.u32 %v75, 4294901760
  %461 = vmatmul.mubr.f32.gmra.mrb[0].mxu0 %v460
  %v462 = vpop.f32.mrb[0].mxu0
  %v463 = vadd.f32 %v293, %v462
  %v464 = vpop.f32.mrb[0].mxu0
  %465 = vmatprep.mubr.f32.mxu0 0.0
  %v466 = vand.u32 %v78, 4294901760
  %467 = vmatmul.mubr.f32.gmra.mrb[0].mxu0 %v466
  %v468 = vpop.f32.mrb[0].mxu0
  %v469 = vadd.f32 %v303, %v468
  %v470 = vpop.f32.mrb[0].mxu0
  %471 = vdwg.mxu0
  %472 = vmatprep.subr.mxu0 0.0
  %v473 = vand.u32 %v30, 4294901760
  %v474 = vsub.f32 %v30, %v473
  %475 = vmatpush1.msra.mxu0 %v474
  %476 = vmatprep.subr.mxu0 0.0
  %477 = vmatpush1.msra.mxu0 0.0
  %478 = vmatprep.subr.mxu0 0.0
  %479 = vmatpush1.msra.mxu0 0.0
  %480 = vmatprep.subr.mxu0 0.0
  %481 = vmatpush1.msra.mxu0 0.0
  %482 = vmatprep.subr.mxu0 0.0
  %483 = vmatpush1.msra.mxu0 0.0
  %484 = vmatprep.subr.mxu0 0.0
  %485 = vmatpush1.msra.mxu0 0.0
  %486 = vmatprep.subr.mxu0 0.0
  %487 = vmatpush1.msra.mxu0 0.0
  %488 = vmatprep.subr.mxu0 0.0
  %489 = vmatpush1.msra.mxu0 0.0
  %490 = vmatprep.subr.mxu0 0.0
  %491 = vmatpush1.msra.mxu0 0.0
  %492 = vmatprep.subr.mxu0 0.0
  %493 = vmatpush1.msra.mxu0 0.0
  %494 = vmatprep.subr.mxu0 0.0
  %495 = vmatpush1.msra.mxu0 0.0
  %496 = vmatprep.subr.mxu0 0.0
  %497 = vmatpush1.msra.mxu0 0.0
  %498 = vmatprep.subr.mxu0 0.0
  %499 = vmatpush1.msra.mxu0 0.0
  %500 = vmatprep.subr.mxu0 0.0
  %501 = vmatpush1.msra.mxu0 0.0
  %502 = vmatprep.subr.mxu0 0.0
  %503 = vmatpush1.msra.mxu0 0.0
  %504 = vmatprep.subr.mxu0 0.0
  %505 = vmatpush1.msra.mxu0 0.0
  %506 = vmatprep.subr.mxu0 0.0
  %507 = vmatpush1.msra.mxu0 0.0
  %508 = vmatprep.subr.mxu0 0.0
  %509 = vmatpush1.msra.mxu0 0.0
  %510 = vmatprep.subr.mxu0 0.0
  %511 = vmatpush1.msra.mxu0 0.0
  %512 = vmatprep.subr.mxu0 0.0
  %513 = vmatpush1.msra.mxu0 0.0
  %514 = vmatprep.subr.mxu0 0.0
  %515 = vmatpush1.msra.mxu0 0.0
  %516 = vmatprep.subr.mxu0 0.0
  %517 = vmatpush1.msra.mxu0 0.0
  %518 = vmatprep.subr.mxu0 0.0
  %519 = vmatpush1.msra.mxu0 0.0
  %520 = vmatprep.subr.mxu0 0.0
  %521 = vmatpush1.msra.mxu0 0.0
  %522 = vmatprep.subr.mxu0 0.0
  %523 = vmatpush1.msra.mxu0 0.0
  %524 = vmatprep.subr.mxu0 0.0
  %525 = vmatpush1.msra.mxu0 0.0
  %526 = vmatprep.subr.mxu0 0.0
  %527 = vmatpush1.msra.mxu0 0.0
  %528 = vmatprep.subr.mxu0 0.0
  %529 = vmatpush1.msra.mxu0 0.0
  %530 = vmatprep.subr.mxu0 0.0
  %531 = vmatpush1.msra.mxu0 0.0
  %532 = vmatprep.subr.mxu0 0.0
  %533 = vmatpush1.msra.mxu0 0.0
  %534 = vmatprep.subr.mxu0 0.0
  %535 = vmatpush1.msra.mxu0 0.0
  %536 = vmatprep.subr.mxu0 0.0
  %537 = vmatpush1.msra.mxu0 0.0
  %538 = vmatprep.mubr.f32.mxu0 0.0
  %v539 = vand.u32 %v33, 4294901760
  %v540 = vsub.f32 %v33, %v539
  %541 = vmatmul.mubr.f32.gmra.mrb[0].mxu0 %v540
  %v542 = vpop.f32.mrb[0].mxu0
  %v543 = vadd.f32 %v379, %v542
  %v544 = vpop.f32.mrb[0].mxu0
  %545 = vmatprep.mubr.f32.mxu0 0.0
  %v546 = vand.u32 %v36, 4294901760
  %v547 = vsub.f32 %v36, %v546
  %548 = vmatmul.mubr.f32.gmra.mrb[0].mxu0 %v547
  %v549 = vpop.f32.mrb[0].mxu0
  %v550 = vadd.f32 %v385, %v549
  %v551 = vpop.f32.mrb[0].mxu0
  %552 = vmatprep.mubr.f32.mxu0 0.0
  %v553 = vand.u32 %v39, 4294901760
  %v554 = vsub.f32 %v39, %v553
  %555 = vmatmul.mubr.f32.gmra.mrb[0].mxu0 %v554
  %v556 = vpop.f32.mrb[0].mxu0
  %v557 = vadd.f32 %v391, %v556
  %v558 = vpop.f32.mrb[0].mxu0
  %559 = vmatprep.mubr.f32.mxu0 0.0
  %v560 = vand.u32 %v42, 4294901760
  %v561 = vsub.f32 %v42, %v560
  %562 = vmatmul.mubr.f32.gmra.mrb[0].mxu0 %v561
  %v563 = vpop.f32.mrb[0].mxu0
  %v564 = vadd.f32 %v397, %v563
  %v565 = vpop.f32.mrb[0].mxu0
  %566 = vmatprep.mubr.f32.mxu0 0.0
  %v567 = vand.u32 %v45, 4294901760
  %v568 = vsub.f32 %v45, %v567
  %569 = vmatmul.mubr.f32.gmra.mrb[0].mxu0 %v568
  %v570 = vpop.f32.mrb[0].mxu0
  %v571 = vadd.f32 %v403, %v570
  %v572 = vpop.f32.mrb[0].mxu0
  %573 = vmatprep.mubr.f32.mxu0 0.0
  %v574 = vand.u32 %v48, 4294901760
  %v575 = vsub.f32 %v48, %v574
  %576 = vmatmul.mubr.f32.gmra.mrb[0].mxu0 %v575
  %v577 = vpop.f32.mrb[0].mxu0
  %v578 = vadd.f32 %v409, %v577
  %v579 = vpop.f32.mrb[0].mxu0
  %580 = vmatprep.mubr.f32.mxu0 0.0
  %v581 = vand.u32 %v51, 4294901760
  %v582 = vsub.f32 %v51, %v581
  %583 = vmatmul.mubr.f32.gmra.mrb[0].mxu0 %v582
  %v584 = vpop.f32.mrb[0].mxu0
  %v585 = vadd.f32 %v415, %v584
  %v586 = vpop.f32.mrb[0].mxu0
  %587 = vmatprep.mubr.f32.mxu0 0.0
  %v588 = vand.u32 %v54, 4294901760
  %v589 = vsub.f32 %v54, %v588
  %590 = vmatmul.mubr.f32.gmra.mrb[0].mxu0 %v589
  %v591 = vpop.f32.mrb[0].mxu0
  %v592 = vadd.f32 %v421, %v591
  %v593 = vpop.f32.mrb[0].mxu0
  %594 = vmatprep.mubr.f32.mxu0 0.0
  %v595 = vand.u32 %v57, 4294901760
  %v596 = vsub.f32 %v57, %v595
  %597 = vmatmul.mubr.f32.gmra.mrb[0].mxu0 %v596
  %v598 = vpop.f32.mrb[0].mxu0
  %v599 = vadd.f32 %v427, %v598
  %v600 = vpop.f32.mrb[0].mxu0
  %601 = vmatprep.mubr.f32.mxu0 0.0
  %v602 = vand.u32 %v60, 4294901760
  %v603 = vsub.f32 %v60, %v602
  %604 = vmatmul.mubr.f32.gmra.mrb[0].mxu0 %v603
  %v605 = vpop.f32.mrb[0].mxu0
  %v606 = vadd.f32 %v433, %v605
  %v607 = vpop.f32.mrb[0].mxu0
  %608 = vmatprep.mubr.f32.mxu0 0.0
  %v609 = vand.u32 %v63, 4294901760
  %v610 = vsub.f32 %v63, %v609
  %611 = vmatmul.mubr.f32.gmra.mrb[0].mxu0 %v610
  %v612 = vpop.f32.mrb[0].mxu0
  %v613 = vadd.f32 %v439, %v612
  %v614 = vpop.f32.mrb[0].mxu0
  %615 = vmatprep.mubr.f32.mxu0 0.0
  %v616 = vand.u32 %v66, 4294901760
  %v617 = vsub.f32 %v66, %v616
  %618 = vmatmul.mubr.f32.gmra.mrb[0].mxu0 %v617
  %v619 = vpop.f32.mrb[0].mxu0
  %v620 = vadd.f32 %v445, %v619
  %v621 = vpop.f32.mrb[0].mxu0
  %622 = vmatprep.mubr.f32.mxu0 0.0
  %v623 = vand.u32 %v69, 4294901760
  %v624 = vsub.f32 %v69, %v623
  %625 = vmatmul.mubr.f32.gmra.mrb[0].mxu0 %v624
  %v626 = vpop.f32.mrb[0].mxu0
  %v627 = vadd.f32 %v451, %v626
  %v628 = vpop.f32.mrb[0].mxu0
  %629 = vmatprep.mubr.f32.mxu0 0.0
  %v630 = vand.u32 %v72, 4294901760
  %v631 = vsub.f32 %v72, %v630
  %632 = vmatmul.mubr.f32.gmra.mrb[0].mxu0 %v631
  %v633 = vpop.f32.mrb[0].mxu0
  %v634 = vadd.f32 %v457, %v633
  %v635 = vpop.f32.mrb[0].mxu0
  %636 = vmatprep.mubr.f32.mxu0 0.0
  %v637 = vand.u32 %v75, 4294901760
  %v638 = vsub.f32 %v75, %v637
  %639 = vmatmul.mubr.f32.gmra.mrb[0].mxu0 %v638
  %v640 = vpop.f32.mrb[0].mxu0
  %v641 = vadd.f32 %v463, %v640
  %v642 = vpop.f32.mrb[0].mxu0
  %643 = vmatprep.mubr.f32.mxu0 0.0
  %v644 = vand.u32 %v78, 4294901760
  %v645 = vsub.f32 %v78, %v644
  %646 = vmatmul.mubr.f32.gmra.mrb[0].mxu0 %v645
  %v647 = vpop.f32.mrb[0].mxu0
  %v648 = vadd.f32 %v469, %v647
  %v649 = vpop.f32.mrb[0].mxu0
  %650 = vdwg.mxu0
  %651 = vmatprep.subr.mxu0 0.0
  %v652 = vand.u32 %v30, 4294901760
  %653 = vmatpush1.msra.mxu0 %v652
  %654 = vmatprep.subr.mxu0 0.0
  %655 = vmatpush1.msra.mxu0 0.0
  %656 = vmatprep.subr.mxu0 0.0
  %657 = vmatpush1.msra.mxu0 0.0
  %658 = vmatprep.subr.mxu0 0.0
  %659 = vmatpush1.msra.mxu0 0.0
  %660 = vmatprep.subr.mxu0 0.0
  %661 = vmatpush1.msra.mxu0 0.0
  %662 = vmatprep.subr.mxu0 0.0
  %663 = vmatpush1.msra.mxu0 0.0
  %664 = vmatprep.subr.mxu0 0.0
  %665 = vmatpush1.msra.mxu0 0.0
  %666 = vmatprep.subr.mxu0 0.0
  %667 = vmatpush1.msra.mxu0 0.0
  %668 = vmatprep.subr.mxu0 0.0
  %669 = vmatpush1.msra.mxu0 0.0
  %670 = vmatprep.subr.mxu0 0.0
  %671 = vmatpush1.msra.mxu0 0.0
  %672 = vmatprep.subr.mxu0 0.0
  %673 = vmatpush1.msra.mxu0 0.0
  %674 = vmatprep.subr.mxu0 0.0
  %675 = vmatpush1.msra.mxu0 0.0
  %676 = vmatprep.subr.mxu0 0.0
  %677 = vmatpush1.msra.mxu0 0.0
  %678 = vmatprep.subr.mxu0 0.0
  %679 = vmatpush1.msra.mxu0 0.0
  %680 = vmatprep.subr.mxu0 0.0
  %681 = vmatpush1.msra.mxu0 0.0
  %682 = vmatprep.subr.mxu0 0.0
  %683 = vmatpush1.msra.mxu0 0.0
  %684 = vmatprep.subr.mxu0 0.0
  %685 = vmatpush1.msra.mxu0 0.0
  %686 = vmatprep.subr.mxu0 0.0
  %687 = vmatpush1.msra.mxu0 0.0
  %688 = vmatprep.subr.mxu0 0.0
  %689 = vmatpush1.msra.mxu0 0.0
  %690 = vmatprep.subr.mxu0 0.0
  %691 = vmatpush1.msra.mxu0 0.0
  %692 = vmatprep.subr.mxu0 0.0
  %693 = vmatpush1.msra.mxu0 0.0
  %694 = vmatprep.subr.mxu0 0.0
  %695 = vmatpush1.msra.mxu0 0.0
  %696 = vmatprep.subr.mxu0 0.0
  %697 = vmatpush1.msra.mxu0 0.0
  %698 = vmatprep.subr.mxu0 0.0
  %699 = vmatpush1.msra.mxu0 0.0
  %700 = vmatprep.subr.mxu0 0.0
  %701 = vmatpush1.msra.mxu0 0.0
  %702 = vmatprep.subr.mxu0 0.0
  %703 = vmatpush1.msra.mxu0 0.0
  %704 = vmatprep.subr.mxu0 0.0
  %705 = vmatpush1.msra.mxu0 0.0
  %706 = vmatprep.subr.mxu0 0.0
  %707 = vmatpush1.msra.mxu0 0.0
  %708 = vmatprep.subr.mxu0 0.0
  %709 = vmatpush1.msra.mxu0 0.0
  %710 = vmatprep.subr.mxu0 0.0
  %711 = vmatpush1.msra.mxu0 0.0
  %712 = vmatprep.subr.mxu0 0.0
  %713 = vmatpush1.msra.mxu0 0.0
  %714 = vmatprep.subr.mxu0 0.0
  %715 = vmatpush1.msra.mxu0 0.0
  %716 = vmatprep.mubr.f32.mxu0 0.0
  %v717 = vand.u32 %v33, 4294901760
  %v718 = vsub.f32 %v33, %v717
  %v719 = vand.u32 %v718, 4294901760
  %720 = vmatmul.mubr.f32.gmra.mrb[0].mxu0 %v719
  %v721 = vpop.f32.mrb[0].mxu0
  %v722 = vadd.f32 %v543, %v721
  %v723 = vpop.f32.mrb[0].mxu0
  %724 = vmatprep.mubr.f32.mxu0 0.0
  %v725 = vand.u32 %v36, 4294901760
  %v726 = vsub.f32 %v36, %v725
  %v727 = vand.u32 %v726, 4294901760
  %728 = vmatmul.mubr.f32.gmra.mrb[0].mxu0 %v727
  %v729 = vpop.f32.mrb[0].mxu0
  %v730 = vadd.f32 %v550, %v729
  %v731 = vpop.f32.mrb[0].mxu0
  %732 = vmatprep.mubr.f32.mxu0 0.0
  %v733 = vand.u32 %v39, 4294901760
  %v734 = vsub.f32 %v39, %v733
  %v735 = vand.u32 %v734, 4294901760
  %736 = vmatmul.mubr.f32.gmra.mrb[0].mxu0 %v735
  %v737 = vpop.f32.mrb[0].mxu0
  %v738 = vadd.f32 %v557, %v737
  %v739 = vpop.f32.mrb[0].mxu0
  %740 = vmatprep.mubr.f32.mxu0 0.0
  %v741 = vand.u32 %v42, 4294901760
  %v742 = vsub.f32 %v42, %v741
  %v743 = vand.u32 %v742, 4294901760
  %744 = vmatmul.mubr.f32.gmra.mrb[0].mxu0 %v743
  %v745 = vpop.f32.mrb[0].mxu0
  %v746 = vadd.f32 %v564, %v745
  %v747 = vpop.f32.mrb[0].mxu0
  %748 = vmatprep.mubr.f32.mxu0 0.0
  %v749 = vand.u32 %v45, 4294901760
  %v750 = vsub.f32 %v45, %v749
  %v751 = vand.u32 %v750, 4294901760
  %752 = vmatmul.mubr.f32.gmra.mrb[0].mxu0 %v751
  %v753 = vpop.f32.mrb[0].mxu0
  %v754 = vadd.f32 %v571, %v753
  %v755 = vpop.f32.mrb[0].mxu0
  %756 = vmatprep.mubr.f32.mxu0 0.0
  %v757 = vand.u32 %v48, 4294901760
  %v758 = vsub.f32 %v48, %v757
  %v759 = vand.u32 %v758, 4294901760
  %760 = vmatmul.mubr.f32.gmra.mrb[0].mxu0 %v759
  %v761 = vpop.f32.mrb[0].mxu0
  %v762 = vadd.f32 %v578, %v761
  %v763 = vpop.f32.mrb[0].mxu0
  %764 = vmatprep.mubr.f32.mxu0 0.0
  %v765 = vand.u32 %v51, 4294901760
  %v766 = vsub.f32 %v51, %v765
  %v767 = vand.u32 %v766, 4294901760
  %768 = vmatmul.mubr.f32.gmra.mrb[0].mxu0 %v767
  %v769 = vpop.f32.mrb[0].mxu0
  %v770 = vadd.f32 %v585, %v769
  %v771 = vpop.f32.mrb[0].mxu0
  %772 = vmatprep.mubr.f32.mxu0 0.0
  %v773 = vand.u32 %v54, 4294901760
  %v774 = vsub.f32 %v54, %v773
  %v775 = vand.u32 %v774, 4294901760
  %776 = vmatmul.mubr.f32.gmra.mrb[0].mxu0 %v775
  %v777 = vpop.f32.mrb[0].mxu0
  %v778 = vadd.f32 %v592, %v777
  %v779 = vpop.f32.mrb[0].mxu0
  %780 = vmatprep.mubr.f32.mxu0 0.0
  %v781 = vand.u32 %v57, 4294901760
  %v782 = vsub.f32 %v57, %v781
  %v783 = vand.u32 %v782, 4294901760
  %784 = vmatmul.mubr.f32.gmra.mrb[0].mxu0 %v783
  %v785 = vpop.f32.mrb[0].mxu0
  %v786 = vadd.f32 %v599, %v785
  %v787 = vpop.f32.mrb[0].mxu0
  %788 = vmatprep.mubr.f32.mxu0 0.0
  %v789 = vand.u32 %v60, 4294901760
  %v790 = vsub.f32 %v60, %v789
  %v791 = vand.u32 %v790, 4294901760
  %792 = vmatmul.mubr.f32.gmra.mrb[0].mxu0 %v791
  %v793 = vpop.f32.mrb[0].mxu0
  %v794 = vadd.f32 %v606, %v793
  %v795 = vpop.f32.mrb[0].mxu0
  %796 = vmatprep.mubr.f32.mxu0 0.0
  %v797 = vand.u32 %v63, 4294901760
  %v798 = vsub.f32 %v63, %v797
  %v799 = vand.u32 %v798, 4294901760
  %800 = vmatmul.mubr.f32.gmra.mrb[0].mxu0 %v799
  %v801 = vpop.f32.mrb[0].mxu0
  %v802 = vadd.f32 %v613, %v801
  %v803 = vpop.f32.mrb[0].mxu0
  %804 = vmatprep.mubr.f32.mxu0 0.0
  %v805 = vand.u32 %v66, 4294901760
  %v806 = vsub.f32 %v66, %v805
  %v807 = vand.u32 %v806, 4294901760
  %808 = vmatmul.mubr.f32.gmra.mrb[0].mxu0 %v807
  %v809 = vpop.f32.mrb[0].mxu0
  %v810 = vadd.f32 %v620, %v809
  %v811 = vpop.f32.mrb[0].mxu0
  %812 = vmatprep.mubr.f32.mxu0 0.0
  %v813 = vand.u32 %v69, 4294901760
  %v814 = vsub.f32 %v69, %v813
  %v815 = vand.u32 %v814, 4294901760
  %816 = vmatmul.mubr.f32.gmra.mrb[0].mxu0 %v815
  %v817 = vpop.f32.mrb[0].mxu0
  %v818 = vadd.f32 %v627, %v817
  %v819 = vpop.f32.mrb[0].mxu0
  %820 = vmatprep.mubr.f32.mxu0 0.0
  %v821 = vand.u32 %v72, 4294901760
  %v822 = vsub.f32 %v72, %v821
  %v823 = vand.u32 %v822, 4294901760
  %824 = vmatmul.mubr.f32.gmra.mrb[0].mxu0 %v823
  %v825 = vpop.f32.mrb[0].mxu0
  %v826 = vadd.f32 %v634, %v825
  %v827 = vpop.f32.mrb[0].mxu0
  %828 = vmatprep.mubr.f32.mxu0 0.0
  %v829 = vand.u32 %v75, 4294901760
  %v830 = vsub.f32 %v75, %v829
  %v831 = vand.u32 %v830, 4294901760
  %832 = vmatmul.mubr.f32.gmra.mrb[0].mxu0 %v831
  %v833 = vpop.f32.mrb[0].mxu0
  %v834 = vadd.f32 %v641, %v833
  %v835 = vpop.f32.mrb[0].mxu0
  %836 = vmatprep.mubr.f32.mxu0 0.0
  %v837 = vand.u32 %v78, 4294901760
  %v838 = vsub.f32 %v78, %v837
  %v839 = vand.u32 %v838, 4294901760
  %840 = vmatmul.mubr.f32.gmra.mrb[0].mxu0 %v839
  %v841 = vpop.f32.mrb[0].mxu0
  %v842 = vadd.f32 %v648, %v841
  %v843 = vpop.f32.mrb[0].mxu0
  %844 = vdwg.mxu0
  %845 = vmatprep.subr.mxu0 0.0
  %v846 = vand.u32 %v30, 4294901760
  %v847 = vsub.f32 %v30, %v846
  %v848 = vand.u32 %v847, 4294901760
  %849 = vmatpush1.msra.mxu0 %v848
  %850 = vmatprep.subr.mxu0 0.0
  %851 = vmatpush1.msra.mxu0 0.0
  %852 = vmatprep.subr.mxu0 0.0
  %853 = vmatpush1.msra.mxu0 0.0
  %854 = vmatprep.subr.mxu0 0.0
  %855 = vmatpush1.msra.mxu0 0.0
  %856 = vmatprep.subr.mxu0 0.0
  %857 = vmatpush1.msra.mxu0 0.0
  %858 = vmatprep.subr.mxu0 0.0
  %859 = vmatpush1.msra.mxu0 0.0
  %860 = vmatprep.subr.mxu0 0.0
  %861 = vmatpush1.msra.mxu0 0.0
  %862 = vmatprep.subr.mxu0 0.0
  %863 = vmatpush1.msra.mxu0 0.0
  %864 = vmatprep.subr.mxu0 0.0
  %865 = vmatpush1.msra.mxu0 0.0
  %866 = vmatprep.subr.mxu0 0.0
  %867 = vmatpush1.msra.mxu0 0.0
  %868 = vmatprep.subr.mxu0 0.0
  %869 = vmatpush1.msra.mxu0 0.0
  %870 = vmatprep.subr.mxu0 0.0
  %871 = vmatpush1.msra.mxu0 0.0
  %872 = vmatprep.subr.mxu0 0.0
  %873 = vmatpush1.msra.mxu0 0.0
  %874 = vmatprep.subr.mxu0 0.0
  %875 = vmatpush1.msra.mxu0 0.0
  %876 = vmatprep.subr.mxu0 0.0
  %877 = vmatpush1.msra.mxu0 0.0
  %878 = vmatprep.subr.mxu0 0.0
  %879 = vmatpush1.msra.mxu0 0.0
  %880 = vmatprep.subr.mxu0 0.0
  %881 = vmatpush1.msra.mxu0 0.0
  %882 = vmatprep.subr.mxu0 0.0
  %883 = vmatpush1.msra.mxu0 0.0
  %884 = vmatprep.subr.mxu0 0.0
  %885 = vmatpush1.msra.mxu0 0.0
  %886 = vmatprep.subr.mxu0 0.0
  %887 = vmatpush1.msra.mxu0 0.0
  %888 = vmatprep.subr.mxu0 0.0
  %889 = vmatpush1.msra.mxu0 0.0
  %890 = vmatprep.subr.mxu0 0.0
  %891 = vmatpush1.msra.mxu0 0.0
  %892 = vmatprep.subr.mxu0 0.0
  %893 = vmatpush1.msra.mxu0 0.0
  %894 = vmatprep.subr.mxu0 0.0
  %895 = vmatpush1.msra.mxu0 0.0
  %896 = vmatprep.subr.mxu0 0.0
  %897 = vmatpush1.msra.mxu0 0.0
  %898 = vmatprep.subr.mxu0 0.0
  %899 = vmatpush1.msra.mxu0 0.0
  %900 = vmatprep.subr.mxu0 0.0
  %901 = vmatpush1.msra.mxu0 0.0
  %902 = vmatprep.subr.mxu0 0.0
  %903 = vmatpush1.msra.mxu0 0.0
  %904 = vmatprep.subr.mxu0 0.0
  %905 = vmatpush1.msra.mxu0 0.0
  %906 = vmatprep.subr.mxu0 0.0
  %907 = vmatpush1.msra.mxu0 0.0
  %908 = vmatprep.subr.mxu0 0.0
  %909 = vmatpush1.msra.mxu0 0.0
  %910 = vmatprep.subr.mxu0 0.0
  %911 = vmatpush1.msra.mxu0 0.0
  %912 = vmatprep.mubr.f32.mxu0 0.0
  %v913 = vand.u32 %v33, 4294901760
  %914 = vmatmul.mubr.f32.gmra.mrb[0].mxu0 %v913
  %v915 = vpop.f32.mrb[0].mxu0
  %v916 = vadd.f32 %v722, %v915
  %v917 = vpop.f32.mrb[0].mxu0
  %918 = vmatprep.mubr.f32.mxu0 0.0
  %v919 = vand.u32 %v36, 4294901760
  %920 = vmatmul.mubr.f32.gmra.mrb[0].mxu0 %v919
  %v921 = vpop.f32.mrb[0].mxu0
  %v922 = vadd.f32 %v730, %v921
  %v923 = vpop.f32.mrb[0].mxu0
  %924 = vmatprep.mubr.f32.mxu0 0.0
  %v925 = vand.u32 %v39, 4294901760
  %926 = vmatmul.mubr.f32.gmra.mrb[0].mxu0 %v925
  %v927 = vpop.f32.mrb[0].mxu0
  %v928 = vadd.f32 %v738, %v927
  %v929 = vpop.f32.mrb[0].mxu0
  %930 = vmatprep.mubr.f32.mxu0 0.0
  %v931 = vand.u32 %v42, 4294901760
  %932 = vmatmul.mubr.f32.gmra.mrb[0].mxu0 %v931
  %v933 = vpop.f32.mrb[0].mxu0
  %v934 = vadd.f32 %v746, %v933
  %v935 = vpop.f32.mrb[0].mxu0
  %936 = vmatprep.mubr.f32.mxu0 0.0
  %v937 = vand.u32 %v45, 4294901760
  %938 = vmatmul.mubr.f32.gmra.mrb[0].mxu0 %v937
  %v939 = vpop.f32.mrb[0].mxu0
  %v940 = vadd.f32 %v754, %v939
  %v941 = vpop.f32.mrb[0].mxu0
  %942 = vmatprep.mubr.f32.mxu0 0.0
  %v943 = vand.u32 %v48, 4294901760
  %944 = vmatmul.mubr.f32.gmra.mrb[0].mxu0 %v943
  %v945 = vpop.f32.mrb[0].mxu0
  %v946 = vadd.f32 %v762, %v945
  %v947 = vpop.f32.mrb[0].mxu0
  %948 = vmatprep.mubr.f32.mxu0 0.0
  %v949 = vand.u32 %v51, 4294901760
  %950 = vmatmul.mubr.f32.gmra.mrb[0].mxu0 %v949
  %v951 = vpop.f32.mrb[0].mxu0
  %v952 = vadd.f32 %v770, %v951
  %v953 = vpop.f32.mrb[0].mxu0
  %954 = vmatprep.mubr.f32.mxu0 0.0
  %v955 = vand.u32 %v54, 4294901760
  %956 = vmatmul.mubr.f32.gmra.mrb[0].mxu0 %v955
  %v957 = vpop.f32.mrb[0].mxu0
  %v958 = vadd.f32 %v778, %v957
  %v959 = vpop.f32.mrb[0].mxu0
  %960 = vmatprep.mubr.f32.mxu0 0.0
  %v961 = vand.u32 %v57, 4294901760
  %962 = vmatmul.mubr.f32.gmra.mrb[0].mxu0 %v961
  %v963 = vpop.f32.mrb[0].mxu0
  %v964 = vadd.f32 %v786, %v963
  %v965 = vpop.f32.mrb[0].mxu0
  %966 = vmatprep.mubr.f32.mxu0 0.0
  %v967 = vand.u32 %v60, 4294901760
  %968 = vmatmul.mubr.f32.gmra.mrb[0].mxu0 %v967
  %v969 = vpop.f32.mrb[0].mxu0
  %v970 = vadd.f32 %v794, %v969
  %v971 = vpop.f32.mrb[0].mxu0
  %972 = vmatprep.mubr.f32.mxu0 0.0
  %v973 = vand.u32 %v63, 4294901760
  %974 = vmatmul.mubr.f32.gmra.mrb[0].mxu0 %v973
  %v975 = vpop.f32.mrb[0].mxu0
  %v976 = vadd.f32 %v802, %v975
  %v977 = vpop.f32.mrb[0].mxu0
  %978 = vmatprep.mubr.f32.mxu0 0.0
  %v979 = vand.u32 %v66, 4294901760
  %980 = vmatmul.mubr.f32.gmra.mrb[0].mxu0 %v979
  %v981 = vpop.f32.mrb[0].mxu0
  %v982 = vadd.f32 %v810, %v981
  %v983 = vpop.f32.mrb[0].mxu0
  %984 = vmatprep.mubr.f32.mxu0 0.0
  %v985 = vand.u32 %v69, 4294901760
  %986 = vmatmul.mubr.f32.gmra.mrb[0].mxu0 %v985
  %v987 = vpop.f32.mrb[0].mxu0
  %v988 = vadd.f32 %v818, %v987
  %v989 = vpop.f32.mrb[0].mxu0
  %990 = vmatprep.mubr.f32.mxu0 0.0
  %v991 = vand.u32 %v72, 4294901760
  %992 = vmatmul.mubr.f32.gmra.mrb[0].mxu0 %v991
  %v993 = vpop.f32.mrb[0].mxu0
  %v994 = vadd.f32 %v826, %v993
  %v995 = vpop.f32.mrb[0].mxu0
  %996 = vmatprep.mubr.f32.mxu0 0.0
  %v997 = vand.u32 %v75, 4294901760
  %998 = vmatmul.mubr.f32.gmra.mrb[0].mxu0 %v997
  %v999 = vpop.f32.mrb[0].mxu0
  %v1000 = vadd.f32 %v834, %v999
  %v1001 = vpop.f32.mrb[0].mxu0
  %1002 = vmatprep.mubr.f32.mxu0 0.0
  %v1003 = vand.u32 %v78, 4294901760
  %1004 = vmatmul.mubr.f32.gmra.mrb[0].mxu0 %v1003
  %v1005 = vpop.f32.mrb[0].mxu0
  %v1006 = vadd.f32 %v842, %v1005
  %v1007 = vpop.f32.mrb[0].mxu0
  %1008 = vdwg.mxu0
  %1009 = vmatprep.subr.mxu0 0.0
  %v1010 = vand.u32 %v30, 4294901760
  %1011 = vmatpush1.msra.mxu0 %v1010
  %1012 = vmatprep.subr.mxu0 0.0
  %1013 = vmatpush1.msra.mxu0 0.0
  %1014 = vmatprep.subr.mxu0 0.0
  %1015 = vmatpush1.msra.mxu0 0.0
  %1016 = vmatprep.subr.mxu0 0.0
  %1017 = vmatpush1.msra.mxu0 0.0
  %1018 = vmatprep.subr.mxu0 0.0
  %1019 = vmatpush1.msra.mxu0 0.0
  %1020 = vmatprep.subr.mxu0 0.0
  %1021 = vmatpush1.msra.mxu0 0.0
  %1022 = vmatprep.subr.mxu0 0.0
  %1023 = vmatpush1.msra.mxu0 0.0
  %1024 = vmatprep.subr.mxu0 0.0
  %1025 = vmatpush1.msra.mxu0 0.0
  %1026 = vmatprep.subr.mxu0 0.0
  %1027 = vmatpush1.msra.mxu0 0.0
  %1028 = vmatprep.subr.mxu0 0.0
  %1029 = vmatpush1.msra.mxu0 0.0
  %1030 = vmatprep.subr.mxu0 0.0
  %1031 = vmatpush1.msra.mxu0 0.0
  %1032 = vmatprep.subr.mxu0 0.0
  %1033 = vmatpush1.msra.mxu0 0.0
  %1034 = vmatprep.subr.mxu0 0.0
  %1035 = vmatpush1.msra.mxu0 0.0
  %1036 = vmatprep.subr.mxu0 0.0
  %1037 = vmatpush1.msra.mxu0 0.0
  %1038 = vmatprep.subr.mxu0 0.0
  %1039 = vmatpush1.msra.mxu0 0.0
  %1040 = vmatprep.subr.mxu0 0.0
  %1041 = vmatpush1.msra.mxu0 0.0
  %1042 = vmatprep.subr.mxu0 0.0
  %1043 = vmatpush1.msra.mxu0 0.0
  %1044 = vmatprep.subr.mxu0 0.0
  %1045 = vmatpush1.msra.mxu0 0.0
  %1046 = vmatprep.subr.mxu0 0.0
  %1047 = vmatpush1.msra.mxu0 0.0
  %1048 = vmatprep.subr.mxu0 0.0
  %1049 = vmatpush1.msra.mxu0 0.0
  %1050 = vmatprep.subr.mxu0 0.0
  %1051 = vmatpush1.msra.mxu0 0.0
  %1052 = vmatprep.subr.mxu0 0.0
  %1053 = vmatpush1.msra.mxu0 0.0
  %1054 = vmatprep.subr.mxu0 0.0
  %1055 = vmatpush1.msra.mxu0 0.0
  %1056 = vmatprep.subr.mxu0 0.0
  %1057 = vmatpush1.msra.mxu0 0.0
  %1058 = vmatprep.subr.mxu0 0.0
  %1059 = vmatpush1.msra.mxu0 0.0
  %1060 = vmatprep.subr.mxu0 0.0
  %1061 = vmatpush1.msra.mxu0 0.0
  %1062 = vmatprep.subr.mxu0 0.0
  %1063 = vmatpush1.msra.mxu0 0.0
  %1064 = vmatprep.subr.mxu0 0.0
  %1065 = vmatpush1.msra.mxu0 0.0
  %1066 = vmatprep.subr.mxu0 0.0
  %1067 = vmatpush1.msra.mxu0 0.0
  %1068 = vmatprep.subr.mxu0 0.0
  %1069 = vmatpush1.msra.mxu0 0.0
  %1070 = vmatprep.subr.mxu0 0.0
  %1071 = vmatpush1.msra.mxu0 0.0
  %1072 = vmatprep.subr.mxu0 0.0
  %1073 = vmatpush1.msra.mxu0 0.0
  %1074 = vmatprep.mubr.f32.mxu0 0.0
  %v1075 = vand.u32 %v33, 4294901760
  %1076 = vmatmul.mubr.f32.gmra.mrb[0].mxu0 %v1075
  %v1077 = vpop.f32.mrb[0].mxu0
  %v1078 = vadd.f32 %v916, %v1077
  %v1079 = vpop.f32.mrb[0].mxu0
  %1080 = vmatprep.mubr.f32.mxu0 0.0
  %v1081 = vand.u32 %v36, 4294901760
  %1082 = vmatmul.mubr.f32.gmra.mrb[0].mxu0 %v1081
  %v1083 = vpop.f32.mrb[0].mxu0
  %v1084 = vadd.f32 %v922, %v1083
  %v1085 = vpop.f32.mrb[0].mxu0
  %1086 = vmatprep.mubr.f32.mxu0 0.0
  %v1087 = vand.u32 %v39, 4294901760
  %1088 = vmatmul.mubr.f32.gmra.mrb[0].mxu0 %v1087
  %v1089 = vpop.f32.mrb[0].mxu0
  %v1090 = vadd.f32 %v928, %v1089
  %v1091 = vpop.f32.mrb[0].mxu0
  %1092 = vmatprep.mubr.f32.mxu0 0.0
  %v1093 = vand.u32 %v42, 4294901760
  %1094 = vmatmul.mubr.f32.gmra.mrb[0].mxu0 %v1093
  %v1095 = vpop.f32.mrb[0].mxu0
  %v1096 = vadd.f32 %v934, %v1095
  %v1097 = vpop.f32.mrb[0].mxu0
  %1098 = vmatprep.mubr.f32.mxu0 0.0
  %v1099 = vand.u32 %v45, 4294901760
  %1100 = vmatmul.mubr.f32.gmra.mrb[0].mxu0 %v1099
  %v1101 = vpop.f32.mrb[0].mxu0
  %v1102 = vadd.f32 %v940, %v1101
  %v1103 = vpop.f32.mrb[0].mxu0
  %1104 = vmatprep.mubr.f32.mxu0 0.0
  %v1105 = vand.u32 %v48, 4294901760
  %1106 = vmatmul.mubr.f32.gmra.mrb[0].mxu0 %v1105
  %v1107 = vpop.f32.mrb[0].mxu0
  %v1108 = vadd.f32 %v946, %v1107
  %v1109 = vpop.f32.mrb[0].mxu0
  %1110 = vmatprep.mubr.f32.mxu0 0.0
  %v1111 = vand.u32 %v51, 4294901760
  %1112 = vmatmul.mubr.f32.gmra.mrb[0].mxu0 %v1111
  %v1113 = vpop.f32.mrb[0].mxu0
  %v1114 = vadd.f32 %v952, %v1113
  %v1115 = vpop.f32.mrb[0].mxu0
  %1116 = vmatprep.mubr.f32.mxu0 0.0
  %v1117 = vand.u32 %v54, 4294901760
  %1118 = vmatmul.mubr.f32.gmra.mrb[0].mxu0 %v1117
  %v1119 = vpop.f32.mrb[0].mxu0
  %v1120 = vadd.f32 %v958, %v1119
  %v1121 = vpop.f32.mrb[0].mxu0
  %1122 = vmatprep.mubr.f32.mxu0 0.0
  %v1123 = vand.u32 %v57, 4294901760
  %1124 = vmatmul.mubr.f32.gmra.mrb[0].mxu0 %v1123
  %v1125 = vpop.f32.mrb[0].mxu0
  %v1126 = vadd.f32 %v964, %v1125
  %v1127 = vpop.f32.mrb[0].mxu0
  %1128 = vmatprep.mubr.f32.mxu0 0.0
  %v1129 = vand.u32 %v60, 4294901760
  %1130 = vmatmul.mubr.f32.gmra.mrb[0].mxu0 %v1129
  %v1131 = vpop.f32.mrb[0].mxu0
  %v1132 = vadd.f32 %v970, %v1131
  %v1133 = vpop.f32.mrb[0].mxu0
  %1134 = vmatprep.mubr.f32.mxu0 0.0
  %v1135 = vand.u32 %v63, 4294901760
  %1136 = vmatmul.mubr.f32.gmra.mrb[0].mxu0 %v1135
  %v1137 = vpop.f32.mrb[0].mxu0
  %v1138 = vadd.f32 %v976, %v1137
  %v1139 = vpop.f32.mrb[0].mxu0
  %1140 = vmatprep.mubr.f32.mxu0 0.0
  %v1141 = vand.u32 %v66, 4294901760
  %1142 = vmatmul.mubr.f32.gmra.mrb[0].mxu0 %v1141
  %v1143 = vpop.f32.mrb[0].mxu0
  %v1144 = vadd.f32 %v982, %v1143
  %v1145 = vpop.f32.mrb[0].mxu0
  %1146 = vmatprep.mubr.f32.mxu0 0.0
  %v1147 = vand.u32 %v69, 4294901760
  %1148 = vmatmul.mubr.f32.gmra.mrb[0].mxu0 %v1147
  %v1149 = vpop.f32.mrb[0].mxu0
  %v1150 = vadd.f32 %v988, %v1149
  %v1151 = vpop.f32.mrb[0].mxu0
  %1152 = vmatprep.mubr.f32.mxu0 0.0
  %v1153 = vand.u32 %v72, 4294901760
  %1154 = vmatmul.mubr.f32.gmra.mrb[0].mxu0 %v1153
  %v1155 = vpop.f32.mrb[0].mxu0
  %v1156 = vadd.f32 %v994, %v1155
  %v1157 = vpop.f32.mrb[0].mxu0
  %1158 = vmatprep.mubr.f32.mxu0 0.0
  %v1159 = vand.u32 %v75, 4294901760
  %1160 = vmatmul.mubr.f32.gmra.mrb[0].mxu0 %v1159
  %v1161 = vpop.f32.mrb[0].mxu0
  %v1162 = vadd.f32 %v1000, %v1161
  %v1163 = vpop.f32.mrb[0].mxu0
  %1164 = vmatprep.mubr.f32.mxu0 0.0
  %v1165 = vand.u32 %v78, 4294901760
  %1166 = vmatmul.mubr.f32.gmra.mrb[0].mxu0 %v1165
  %v1167 = vpop.f32.mrb[0].mxu0
  %v1168 = vadd.f32 %v1006, %v1167
  %v1169 = vpop.f32.mrb[0].mxu0
  %1170 = vdwg.mxu0
  %vm1171 = vcmp.lt.f32.partialorder %v1078, 25.0
  %vm1172 = vcmp.lt.f32.partialorder %v1084, 25.0
  %vm1173 = vcmp.lt.f32.partialorder %v1090, 25.0
  %vm1174 = vcmp.lt.f32.partialorder %v1096, 25.0
  %vm1175 = vcmp.lt.f32.partialorder %v1102, 25.0
  %vm1176 = vcmp.lt.f32.partialorder %v1108, 25.0
  %vm1177 = vcmp.lt.f32.partialorder %v1114, 25.0
  %vm1178 = vcmp.lt.f32.partialorder %v1120, 25.0
  %vm1179 = vcmp.lt.f32.partialorder %v1126, 25.0
  %vm1180 = vcmp.lt.f32.partialorder %v1132, 25.0
  %vm1181 = vcmp.lt.f32.partialorder %v1138, 25.0
  %vm1182 = vcmp.lt.f32.partialorder %v1144, 25.0
  %vm1183 = vcmp.lt.f32.partialorder %v1150, 25.0
  %vm1184 = vcmp.lt.f32.partialorder %v1156, 25.0
  %vm1185 = vcmp.lt.f32.partialorder %v1162, 25.0
  %vm1186 = vcmp.lt.f32.partialorder %v1168, 25.0
  %s1187 = smul.u32 0, 16384
  %s1188 = smul.u32 0, 128
  %s1189 = sadd.s32 %s1187, %s1188
  %v1190 = vld [vmem:[%s2] sm:$0xff]
  %v1191 = vld [vmem:[%s2 + $0x8] sm:$0xff]
  %v1192 = vld [vmem:[%s2 + $0x10] sm:$0xff]
  %v1193 = vld [vmem:[%s2 + $0x18] sm:$0xff]
  %v1194 = vld [vmem:[%s2 + $0x20] sm:$0xff]
  %v1195 = vld [vmem:[%s2 + $0x28] sm:$0xff]
  %v1196 = vld [vmem:[%s2 + $0x30] sm:$0xff]
  %v1197 = vld [vmem:[%s2 + $0x38] sm:$0xff]
  %v1198 = vld [vmem:[%s2 + $0x40] sm:$0xff]
  %v1199 = vld [vmem:[%s2 + $0x48] sm:$0xff]
  %v1200 = vld [vmem:[%s2 + $0x50] sm:$0xff]
  %v1201 = vld [vmem:[%s2 + $0x58] sm:$0xff]
  %v1202 = vld [vmem:[%s2 + $0x60] sm:$0xff]
  %v1203 = vld [vmem:[%s2 + $0x68] sm:$0xff]
  %v1204 = vld [vmem:[%s2 + $0x70] sm:$0xff]
  %v1205 = vld [vmem:[%s2 + $0x78] sm:$0xff]
  %v1206 = vstv %s1189
  %v1207 = vadd.s32 %v1190, %v1206
  %v1208 = vadd.s32 %v1191, %v1206
  %v1209 = vadd.s32 %v1192, %v1206
  %v1210 = vadd.s32 %v1193, %v1206
  %v1211 = vadd.s32 %v1194, %v1206
  %v1212 = vadd.s32 %v1195, %v1206
  %v1213 = vadd.s32 %v1196, %v1206
  %v1214 = vadd.s32 %v1197, %v1206
  %v1215 = vadd.s32 %v1198, %v1206
  %v1216 = vadd.s32 %v1199, %v1206
  %v1217 = vadd.s32 %v1200, %v1206
  %v1218 = vadd.s32 %v1201, %v1206
  %v1219 = vadd.s32 %v1202, %v1206
  %v1220 = vadd.s32 %v1203, %v1206
  %v1221 = vadd.s32 %v1204, %v1206
  %v1222 = vadd.s32 %v1205, %v1206
  %v1223 = vsel %vm1171, %v1207, 16384
  %v1224 = vsel %vm1172, %v1208, 16384
  %v1225 = vsel %vm1173, %v1209, 16384
  %v1226 = vsel %vm1174, %v1210, 16384
  %v1227 = vsel %vm1175, %v1211, 16384
  %v1228 = vsel %vm1176, %v1212, 16384
  %v1229 = vsel %vm1177, %v1213, 16384
  %v1230 = vsel %vm1178, %v1214, 16384
  %v1231 = vsel %vm1179, %v1215, 16384
  %v1232 = vsel %vm1180, %v1216, 16384
  %v1233 = vsel %vm1181, %v1217, 16384
  %v1234 = vsel %vm1182, %v1218, 16384
  %v1235 = vsel %vm1183, %v1219, 16384
  %v1236 = vsel %vm1184, %v1220, 16384
  %v1237 = vsel %vm1185, %v1221, 16384
  %v1238 = vsel %vm1186, %v1222, 16384
  %p1239 = scmp.ne.s32.totalorder 0, 0
  // Predicated region
  $region14: #{optimized_distance.1} parent=0 // pred_check
    %p1240 = pneg %p1239
  $region15: #{optimized_distance.1} parent=0 // pred_check_branch
    %1242 = sbr.rel (%p1240) target = $region17
  $region16: #{optimized_distance.1} parent=0 // pred_region
    %1243 = vst [vmem:[%s3] sm:$0xff] %v1223
    %1244 = vst [vmem:[%s3 + $0x8] sm:$0xff] %v1224
    %1245 = vst [vmem:[%s3 + $0x10] sm:$0xff] %v1225
    %1246 = vst [vmem:[%s3 + $0x18] sm:$0xff] %v1226
    %1247 = vst [vmem:[%s3 + $0x20] sm:$0xff] %v1227
    %1248 = vst [vmem:[%s3 + $0x28] sm:$0xff] %v1228
    %1249 = vst [vmem:[%s3 + $0x30] sm:$0xff] %v1229
    %1250 = vst [vmem:[%s3 + $0x38] sm:$0xff] %v1230
    %1251 = vst [vmem:[%s3 + $0x40] sm:$0xff] %v1231
    %1252 = vst [vmem:[%s3 + $0x48] sm:$0xff] %v1232
    %1253 = vst [vmem:[%s3 + $0x50] sm:$0xff] %v1233
    %1254 = vst [vmem:[%s3 + $0x58] sm:$0xff] %v1234
    %1255 = vst [vmem:[%s3 + $0x60] sm:$0xff] %v1235
    %1256 = vst [vmem:[%s3 + $0x68] sm:$0xff] %v1236
    %1257 = vst [vmem:[%s3 + $0x70] sm:$0xff] %v1237
    %1258 = vst [vmem:[%s3 + $0x78] sm:$0xff] %v1238
  $region17: #{optimized_distance.1} parent=0 // pred_fallthru
    _
  %p1259 = scmp.eq.s32.totalorder 0, 0
  // Predicated region
  $region18: #{optimized_distance.1} parent=0 // pred_check
    %p1260 = pneg %p1259
  $region19: #{optimized_distance.1} parent=0 // pred_check_branch
    %1262 = sbr.rel (%p1260) target = $region21
  $region20: #{optimized_distance.1} parent=0 // pred_region
    %v1263 = vlaneseq
    %v1264 = vshrl.u32 %v1263, 7
    %v1265 = vadd.s32 %v1264, 8
    %v1266 = vadd.s32 %v1264, 16
    %v1267 = vadd.s32 %v1264, 24
    %v1268 = vadd.s32 %v1264, 32
    %v1269 = vadd.s32 %v1264, 40
    %v1270 = vadd.s32 %v1264, 48
    %v1271 = vadd.s32 %v1264, 56
    %v1272 = vadd.s32 %v1264, 64
    %v1273 = vadd.s32 %v1264, 72
    %v1274 = vadd.s32 %v1264, 80
    %v1275 = vadd.s32 %v1264, 88
    %v1276 = vadd.s32 %v1264, 96
    %v1277 = vadd.s32 %v1264, 104
    %v1278 = vadd.s32 %v1264, 112
    %v1279 = vadd.s32 %v1264, 120
    %v1280 = vlaneseq
    %v1281 = vand.u32 %v1280, 127
    %vm1282 = vcmp.eq.s32.totalorder %v1264, %v1281
    %vm1283 = vcmp.eq.s32.totalorder %v1265, %v1281
    %vm1284 = vcmp.eq.s32.totalorder %v1266, %v1281
    %vm1285 = vcmp.eq.s32.totalorder %v1267, %v1281
    %vm1286 = vcmp.eq.s32.totalorder %v1268, %v1281
    %vm1287 = vcmp.eq.s32.totalorder %v1269, %v1281
    %vm1288 = vcmp.eq.s32.totalorder %v1270, %v1281
    %vm1289 = vcmp.eq.s32.totalorder %v1271, %v1281
    %vm1290 = vcmp.eq.s32.totalorder %v1272, %v1281
    %vm1291 = vcmp.eq.s32.totalorder %v1273, %v1281
    %vm1292 = vcmp.eq.s32.totalorder %v1274, %v1281
    %vm1293 = vcmp.eq.s32.totalorder %v1275, %v1281
    %vm1294 = vcmp.eq.s32.totalorder %v1276, %v1281
    %vm1295 = vcmp.eq.s32.totalorder %v1277, %v1281
    %vm1296 = vcmp.eq.s32.totalorder %v1278, %v1281
    %vm1297 = vcmp.eq.s32.totalorder %v1279, %v1281
    %v1298 = vsel %vm1282, 16384, %v1223
    %v1299 = vsel %vm1283, 16384, %v1224
    %v1300 = vsel %vm1284, 16384, %v1225
    %v1301 = vsel %vm1285, 16384, %v1226
    %v1302 = vsel %vm1286, 16384, %v1227
    %v1303 = vsel %vm1287, 16384, %v1228
    %v1304 = vsel %vm1288, 16384, %v1229
    %v1305 = vsel %vm1289, 16384, %v1230
    %v1306 = vsel %vm1290, 16384, %v1231
    %v1307 = vsel %vm1291, 16384, %v1232
    %v1308 = vsel %vm1292, 16384, %v1233
    %v1309 = vsel %vm1293, 16384, %v1234
    %v1310 = vsel %vm1294, 16384, %v1235
    %v1311 = vsel %vm1295, 16384, %v1236
    %v1312 = vsel %vm1296, 16384, %v1237
    %v1313 = vsel %vm1297, 16384, %v1238
    %1314 = vst [vmem:[%s3] sm:$0xff] %v1298
    %1315 = vst [vmem:[%s3 + $0x8] sm:$0xff] %v1299
    %1316 = vst [vmem:[%s3 + $0x10] sm:$0xff] %v1300
    %1317 = vst [vmem:[%s3 + $0x18] sm:$0xff] %v1301
    %1318 = vst [vmem:[%s3 + $0x20] sm:$0xff] %v1302
    %1319 = vst [vmem:[%s3 + $0x28] sm:$0xff] %v1303
    %1320 = vst [vmem:[%s3 + $0x30] sm:$0xff] %v1304
    %1321 = vst [vmem:[%s3 + $0x38] sm:$0xff] %v1305
    %1322 = vst [vmem:[%s3 + $0x40] sm:$0xff] %v1306
    %1323 = vst [vmem:[%s3 + $0x48] sm:$0xff] %v1307
    %1324 = vst [vmem:[%s3 + $0x50] sm:$0xff] %v1308
    %1325 = vst [vmem:[%s3 + $0x58] sm:$0xff] %v1309
    %1326 = vst [vmem:[%s3 + $0x60] sm:$0xff] %v1310
    %1327 = vst [vmem:[%s3 + $0x68] sm:$0xff] %v1311
    %1328 = vst [vmem:[%s3 + $0x70] sm:$0xff] %v1312
    %1329 = vst [vmem:[%s3 + $0x78] sm:$0xff] %v1313
  $region21: #{optimized_distance.1} parent=0 // pred_fallthru
    _
  // Predicated region
  $region22: #{optimized_distance.1} parent=0 // pred_check
    _
  $region23: #{optimized_distance.1} parent=0 // pred_check_branch
    %1331 = sbr.rel (0) target = $region25
  $region24: #{optimized_distance.1} parent=0 // pred_region
    _
  $region25: #{optimized_distance.1} parent=0 // pred_fallthru
    _
  // Predicated region
  $region26: #{optimized_distance.1} parent=0 // pred_check
    _
  $region27: #{optimized_distance.1} parent=0 // pred_check_branch
    %1333 = sbr.rel (0) target = $region29
  $region28: #{optimized_distance.1} parent=0 // pred_region
    _
  $region29: #{optimized_distance.1} parent=0 // pred_fallthru
    _

</llo_original>
